<compile_context>
chip_gen: v7x
topology: tpu7x:2x2x1
jax: 0.10.0
libtpu: 0.0.40
codegen_flags: <defaults>
</compile_context>

<pallas_src>
import jax
import jax.numpy as jnp
from jax.experimental import pallas as pl
from jax.experimental.pallas import tpu as pltpu

EPS = 1e-5
_MiB = 1024 * 1024
_FIXED_RESERVE_BYTES = 6 * _MiB   # params, averaging matrix, compiler scratch headroom
_NUM_F32_TEMPS = 5                # conservative per-row count of in-kernel f32 temps
_SUBLANE_MULT = {4: 8, 2: 16, 1: 32}


def _round_up(x, m):
    return ((x + m - 1) // m) * m


def _vmem_params():
    """Generation-aware scoped-VMEM limit and per-input-block DMA byte target."""
    try:
        cap = int(pltpu.get_tpu_info().vmem_capacity_bytes)
    except Exception:  # conservative fallback if the query is unavailable
        cap = 64 * _MiB
    if cap >= 96 * _MiB:               # v5e / v6e: 128 MiB VMEM, slower HBM
        vmem_limit = min(100 * _MiB, (cap * 3) // 4)
        target_block_bytes = 4 * _MiB
    else:                              # v7x: 64 MiB VMEM per TC, ~3.2 TB/s HBM
        vmem_limit = (cap * 3) // 4
        target_block_bytes = 8 * _MiB
    return int(vmem_limit), int(target_block_bytes)


def _choose_tile_rows(num_rows, lane_width, itemsize, vmem_limit, target_block_bytes):
    """Largest sublane-aligned row tile such that (a) the double-buffered in/out
    blocks plus in-kernel f32 temps fit the scoped-VMEM budget and (b) the input
    block hits the multi-MiB DMA target; then shrink so mid-size problems still
    get >=4 grid steps (megacore balance on v7x + pipeline occupancy)."""
    mult = _SUBLANE_MULT.get(itemsize, 8)
    in_row = lane_width * itemsize
    out_row = lane_width * itemsize
    temp_row = _NUM_F32_TEMPS * lane_width * 4
    per_row = 2 * in_row + 2 * out_row + temp_row
    budget = max(per_row * mult, vmem_limit - _FIXED_RESERVE_BYTES)
    tile = min(budget // per_row, max(mult, target_block_bytes // in_row))
    # Never allocate blocks far past the problem itself.
    tile = min(tile, _round_up(max(num_rows, 1), mult))
    tile = max(mult, (tile // mult) * mult)
    # Prefer >=4 (>=2 for small R) pipelined steps when the problem allows.
    if num_rows > 2 * mult:
        min_steps = 4 if num_rows >= 4 * mult else 2
        tile = min(tile, max(mult, _round_up(pl.cdiv(num_rows, min_steps), mult)))
    return int(tile)


def _make_rows_kernel(has_bias, true_d, padded_d):
    """Plain path: one logical row per sublane row; block last dim = padded_d
    (a multiple of 128, so loads/stores are full-lane). If padded_d > true_d the
    padded lanes are masked out of the reductions (two-pass, torch-matching)."""
    needs_mask = padded_d != true_d
    inv_d = 1.0 / float(true_d)

    def compute(x_ref, w_ref, b_ref, o_ref):
        x = x_ref[...].astype(jnp.float32)
        w = w_ref[...].astype(jnp.float32)
        if needs_mask:
            lane = jax.lax.broadcasted_iota(jnp.int32, x.shape, x.ndim - 1)
            valid = lane < true_d
            mean = jnp.sum(jnp.where(valid, x, 0.0), axis=-1, keepdims=True) * inv_d
            xc = jnp.where(valid, x - mean, 0.0)
        else:
            mean = jnp.mean(x, axis=-1, keepdims=True)
            xc = x - mean
        var = jnp.sum(xc * xc, axis=-1, keepdims=True) * inv_d
        y = xc * jax.lax.rsqrt(var + EPS) * w
        if b_ref is not None:
            y = y + b_ref[...].astype(jnp.float32)
        o_ref[...] = y.astype(o_ref.dtype)

    if has_bias:
        def kernel(x_ref, w_ref, b_ref, o_ref):
            compute(x_ref, w_ref, b_ref, o_ref)
    else:
        def kernel(x_ref, w_ref, o_ref):
            compute(x_ref, w_ref, None, o_ref)
    return kernel


def _make_folded_kernel(has_bias, mxu_dtype):
    """Lane-folded path: 128//D logical rows packed per 128-lane sublane row.

    m_ref is a (128,128) block-diagonal averaging matrix (1/D within each D-lane
    group); z @ m broadcasts each group's mean of z across that group, keeping
    lane groups (logical rows) independent. Variance is two-pass (center, then
    average the squares) to avoid E[x^2]-mean^2 cancellation at no extra MXU cost.
    """
    def compute(x_ref, w_ref, b_ref, m_ref, o_ref):
        x = x_ref[...].astype(jnp.float32)
        m = m_ref[...].astype(mxu_dtype)
        mean = jnp.dot(x_ref[...].astype(mxu_dtype), m,
                       preferred_element_type=jnp.float32)
        xc = x - mean
        var = jnp.dot((xc * xc).astype(mxu_dtype), m,
                      preferred_element_type=jnp.float32)
        y = xc * jax.lax.rsqrt(var + EPS) * w_ref[...].astype(jnp.float32)
        if b_ref is not None:
            y = y + b_ref[...].astype(jnp.float32)
        o_ref[...] = y.astype(o_ref.dtype)

    if has_bias:
        def kernel(x_ref, w_ref, b_ref, m_ref, o_ref):
            compute(x_ref, w_ref, b_ref, m_ref, o_ref)
    else:
        def kernel(x_ref, w_ref, m_ref, o_ref):
            compute(x_ref, w_ref, None, m_ref, o_ref)
    return kernel


def layer_norm(x, weight, bias=None):
    """LayerNorm over the last dimension (eps=1e-5). `bias=None` means no bias."""
    orig_shape = x.shape
    D = int(orig_shape[-1])
    R = 1
    for s in orig_shape[:-1]:
        R *= int(s)
    if R == 0 or D == 0:
        return x

    has_bias = bias is not None
    x2 = x.reshape(R, D)
    itemsize = jnp.dtype(x.dtype).itemsize
    vmem_limit, target_block_bytes = _vmem_params()
    compiler_params = pltpu.CompilerParams(
        dimension_semantics=("parallel",),
        vmem_limit_bytes=vmem_limit,
    )

    fold = (D < 128) and (128 % D == 0)
    if fold:
        G = 128 // D
        Rpad = _round_up(R, G)
        xp = x2 if Rpad == R else jnp.pad(x2, ((0, Rpad - R), (0, 0)))
        Rf = Rpad // G
        xf = xp.reshape(Rf, 128)               # row-major view
        wf = jnp.tile(weight, G).reshape(1, 128)
        seg = jnp.arange(128, dtype=jnp.int32) // D
        avg = (seg[:, None] == seg[None, :]).astype(jnp.float32) / float(D)

        tile_rows = _choose_tile_rows(Rf, 128, itemsize, vmem_limit, target_block_bytes)
        grid = (pl.cdiv(Rf, tile_rows),)
        mxu_dtype = jnp.bfloat16 if x.dtype == jnp.bfloat16 else jnp.float32
        # TODO(synk): if f32 averaging matmuls prove MXU-bound on v5e, switch to an
        # XLU roll-based shift-add tree for the group reductions.
        kernel = _make_folded_kernel(has_bias, mxu_dtype)

        in_specs = [pl.BlockSpec((tile_rows, 128), lambda i: (i, 0)),
                    pl.BlockSpec((1, 128), lambda i: (0, 0))]
        operands = [xf, wf]
        if has_bias:
            in_specs.append(pl.BlockSpec((1, 128), lambda i: (0, 0)))
            operands.append(jnp.tile(bias, G).reshape(1, 128))
        in_specs.append(pl.BlockSpec((128, 128), lambda i: (0, 0)))
        operands.append(avg)

        cost = pl.CostEstimate(
            flops=int(8 * Rpad * D + 4 * Rf * 128 * 128),
            transcendentals=int(Rpad),
            bytes_accessed=int(2 * Rpad * D * itemsize + 3 * 128 * 128 * 4),
        )
        out = pl.pallas_call(
            kernel,
            out_shape=jax.ShapeDtypeStruct((Rf, 128), x.dtype),
            grid_spec=pltpu.PrefetchScalarGridSpec(
                num_scalar_prefetch=0,
                grid=grid,
                in_specs=in_specs,
                out_specs=pl.BlockSpec((tile_rows, 128), lambda i: (i, 0)),
            ),
            compiler_params=compiler_params,
            cost_estimate=cost,
        )(*operands)
        out = out.reshape(Rpad, D)
        if Rpad != R:
            out = out[:R]
        return out.reshape(orig_shape)

    # Plain path: one logical row per sublane row.  If D is not a multiple of 128,
    # pad the feature dim (masked inside the kernel, divided by the true D) so
    # loads/stores stay full-lane instead of masked partial stores.
    Dp = _round_up(D, 128)
    if Dp != D:
        x_in = jnp.pad(x2, ((0, 0), (0, Dp - D)))
        w_in = jnp.pad(weight, (0, Dp - D)).reshape(1, Dp)
        b_in = jnp.pad(bias, (0, Dp - D)).reshape(1, Dp) if has_bias else None
    else:
        x_in = x2
        w_in = weight.reshape(1, Dp)
        b_in = bias.reshape(1, Dp) if has_bias else None

    tile_rows = _choose_tile_rows(R, Dp, itemsize, vmem_limit, target_block_bytes)
    grid = (pl.cdiv(R, tile_rows),)
    kernel = _make_rows_kernel(has_bias, D, Dp)

    in_specs = [pl.BlockSpec((tile_rows, Dp), lambda i: (i, 0)),
                pl.BlockSpec((1, Dp), lambda i: (0, 0))]
    operands = [x_in, w_in]
    if has_bias:
        in_specs.append(pl.BlockSpec((1, Dp), lambda i: (0, 0)))
        operands.append(b_in)

    cost = pl.CostEstimate(
        flops=int(8 * R * Dp),
        transcendentals=int(R),
        bytes_accessed=int(2 * R * Dp * itemsize + 2 * Dp * 4),
    )
    out = pl.pallas_call(
        kernel,
        out_shape=jax.ShapeDtypeStruct((R, Dp), x.dtype),
        grid_spec=pltpu.PrefetchScalarGridSpec(
            num_scalar_prefetch=0,
            grid=grid,
            in_specs=in_specs,
            out_specs=pl.BlockSpec((tile_rows, Dp), lambda i: (i, 0)),
        ),
        compiler_params=compiler_params,
        cost_estimate=cost,
    )(*operands)
    if Dp != D:
        out = out[:, :D]
    return out.reshape(orig_shape)


def _reference_layer_norm(x, weight, bias):
    xf = x.astype(jnp.float32)
    mean = jnp.mean(xf, axis=-1, keepdims=True)
    var = jnp.mean((xf - mean) ** 2, axis=-1, keepdims=True)
    y = (xf - mean) / jnp.sqrt(var + EPS)
    y = y * weight
    if bias is not None:
        y = y + bias
    return y.astype(x.dtype)


if __name__ == "__main__":
    key = jax.random.PRNGKey(0)
    batch, seq, hidden = 2, 8, 32   # ndim = hidden = 32

    x = jax.random.normal(key, (batch, seq, hidden), dtype=jnp.float32)
    weight = jnp.ones((hidden,), dtype=jnp.float32)    # nn.Parameter(torch.ones(ndim))
    bias = jnp.zeros((hidden,), dtype=jnp.float32)     # bias=True case

    out = jax.block_until_ready(layer_norm(x, weight, bias))
    ref = _reference_layer_norm(x, weight, bias)
    assert out.shape == x.shape
    assert jnp.allclose(out, ref, atol=1e-5, rtol=1e-5), "mismatch vs reference"

    # bias=False path (dedicated kernel variant, no zero-bias DMA)
    out_nb = jax.block_until_ready(layer_norm(x, weight, None))
    ref_nb = _reference_layer_norm(x, weight, None)
    assert jnp.allclose(out_nb, ref_nb, atol=1e-5, rtol=1e-5), "mismatch (no bias)"

    # Plain path, lane-dense D, row count not a multiple of the tile (boundary clip).
    x3 = jax.random.normal(jax.random.PRNGKey(1), (3, 7, 256), dtype=jnp.float32)
    w3 = jax.random.normal(jax.random.PRNGKey(2), (256,), dtype=jnp.float32)
    b3 = jax.random.normal(jax.random.PRNGKey(3), (256,), dtype=jnp.float32)
    out3 = jax.block_until_ready(layer_norm(x3, w3, b3))
    ref3 = _reference_layer_norm(x3, w3, b3)
    assert jnp.allclose(out3, ref3, atol=1e-4, rtol=1e-4), "mismatch (plain path)"

    # Plain path with D not a multiple of 128 (padded + masked, lane-dense stores).
    x4 = jax.random.normal(jax.random.PRNGKey(4), (2, 5, 96), dtype=jnp.float32)
    w4 = jax.random.normal(jax.random.PRNGKey(5), (96,), dtype=jnp.float32)
    b4 = jax.random.normal(jax.random.PRNGKey(6), (96,), dtype=jnp.float32)
    out4 = jax.block_until_ready(layer_norm(x4, w4, b4))
    ref4 = _reference_layer_norm(x4, w4, b4)
    assert jnp.allclose(out4, ref4, atol=1e-4, rtol=1e-4), "mismatch (padded-D path)"

    # Folded path with R not a multiple of 128//D (row-padded, sliced off).
    x5 = jax.random.normal(jax.random.PRNGKey(7), (1, 5, 32), dtype=jnp.float32) + 3.0
    w5 = jax.random.normal(jax.random.PRNGKey(8), (32,), dtype=jnp.float32)
    out5 = jax.block_until_ready(layer_norm(x5, w5, None))
    ref5 = _reference_layer_norm(x5, w5, None)
    assert jnp.allclose(out5, ref5, atol=1e-4, rtol=1e-4), "mismatch (padded-R fold)"

    print("KERNEL_OK")
</pallas_src>

<mosaic_0001>
module attributes {stable_mosaic.version = 11 : i64} {
  func.func @kernel(%arg0: i32, %arg1: memref<8x128xf32, #tpu.memory_space<vmem>>, %arg2: memref<1x128xf32, #tpu.memory_space<vmem>>, %arg3: memref<1x128xf32, #tpu.memory_space<vmem>>, %arg4: memref<128x128xf32, #tpu.memory_space<vmem>>, %arg5: memref<8x128xf32, #tpu.memory_space<vmem>>) attributes {dimension_semantics = [#tpu.dimension_semantics<parallel>], iteration_bounds = array<i64: 1>, scalar_prefetch = 0 : i64, scratch_operands = 0 : i64, tpu.core_type = #tpu.core_type<tc>, window_params = [{transform_indices = @transform_0, window_bounds = array<i64: 8, 128>}, {pipeline_mode = #tpu.pipeline_mode<synchronous>, transform_indices = @transform_1, window_bounds = array<i64: 1, 128>}, {pipeline_mode = #tpu.pipeline_mode<synchronous>, transform_indices = @transform_2, window_bounds = array<i64: 1, 128>}, {pipeline_mode = #tpu.pipeline_mode<synchronous>, transform_indices = @transform_3, window_bounds = array<i64: 128, 128>}, {transform_indices = @transform_4, window_bounds = array<i64: 8, 128>}]} {
    %c0 = arith.constant 0 : index
    %c0_0 = arith.constant 0 : index
    %0 = vector.load %arg1[%c0, %c0_0] : memref<8x128xf32, #tpu.memory_space<vmem>>, vector<8x128xf32>
    %c0_1 = arith.constant 0 : index
    %c0_2 = arith.constant 0 : index
    %1 = vector.load %arg4[%c0_1, %c0_2] : memref<128x128xf32, #tpu.memory_space<vmem>>, vector<128x128xf32>
    %c0_3 = arith.constant 0 : index
    %c0_4 = arith.constant 0 : index
    %2 = vector.load %arg1[%c0_3, %c0_4] : memref<8x128xf32, #tpu.memory_space<vmem>>, vector<8x128xf32>
    %cst = arith.constant dense<0.000000e+00> : vector<8x128xf32>
    %3 = tpu.matmul %2, %1, %cst {dimension_numbers = #tpu.dot_dimension_numbers<[1], [0], [0], [1], [0, 0, 1, 1], [], []>} : vector<8x128xf32>, vector<128x128xf32>, vector<8x128xf32> -> vector<8x128xf32>
    %4 = arith.subf %0, %3 : vector<8x128xf32>
    %5 = arith.mulf %4, %4 : vector<8x128xf32>
    %cst_5 = arith.constant dense<0.000000e+00> : vector<8x128xf32>
    %6 = tpu.matmul %5, %1, %cst_5 {dimension_numbers = #tpu.dot_dimension_numbers<[1], [0], [0], [1], [0, 0, 1, 1], [], []>} : vector<8x128xf32>, vector<128x128xf32>, vector<8x128xf32> -> vector<8x128xf32>
    %cst_6 = arith.constant 9.99999974E-6 : f32
    %7 = vector.broadcast %cst_6 : f32 to vector<8x128xf32>
    %8 = arith.addf %6, %7 : vector<8x128xf32>
    %9 = math.rsqrt %8 : vector<8x128xf32>
    %10 = arith.mulf %4, %9 : vector<8x128xf32>
    %c0_7 = arith.constant 0 : index
    %c0_8 = arith.constant 0 : index
    %11 = vector.load %arg2[%c0_7, %c0_8] : memref<1x128xf32, #tpu.memory_space<vmem>>, vector<1x128xf32>
    %12 = vector.broadcast %11 : vector<1x128xf32> to vector<8x128xf32>
    %13 = arith.mulf %10, %12 : vector<8x128xf32>
    %c0_9 = arith.constant 0 : index
    %c0_10 = arith.constant 0 : index
    %14 = vector.load %arg3[%c0_9, %c0_10] : memref<1x128xf32, #tpu.memory_space<vmem>>, vector<1x128xf32>
    %15 = vector.broadcast %14 : vector<1x128xf32> to vector<8x128xf32>
    %16 = arith.addf %13, %15 : vector<8x128xf32>
    %c0_11 = arith.constant 0 : index
    %c0_12 = arith.constant 0 : index
    %17 = vector.load %arg5[%c0_11, %c0_12] : memref<8x128xf32, #tpu.memory_space<vmem>>, vector<8x128xf32>
    tpu.vector_store %arg5[%c0_11, %c0_12], %16 {strides = array<i32>} : memref<8x128xf32, #tpu.memory_space<vmem>>, vector<8x128xf32>,
    return
  }
  func.func @transform_0(%arg0: i32) -> (i32, i32) {
    %c0_i32 = arith.constant 0 : i32
    %c0_i32_0 = arith.constant 0 : i32
    return %arg0, %c0_i32 : i32, i32
  }
  func.func @transform_1(%arg0: i32) -> (i32, i32) {
    %c0_i32 = arith.constant 0 : i32
    %c0_i32_0 = arith.constant 0 : i32
    %c0_i32_1 = arith.constant 0 : i32
    return %c0_i32, %c0_i32_0 : i32, i32
  }
  func.func @transform_2(%arg0: i32) -> (i32, i32) {
    %c0_i32 = arith.constant 0 : i32
    %c0_i32_0 = arith.constant 0 : i32
    %c0_i32_1 = arith.constant 0 : i32
    return %c0_i32, %c0_i32_0 : i32, i32
  }
  func.func @transform_3(%arg0: i32) -> (i32, i32) {
    %c0_i32 = arith.constant 0 : i32
    %c0_i32_0 = arith.constant 0 : i32
    %c0_i32_1 = arith.constant 0 : i32
    return %c0_i32, %c0_i32_0 : i32, i32
  }
  func.func @transform_4(%arg0: i32) -> (i32, i32) {
    %c0_i32 = arith.constant 0 : i32
    %c0_i32_0 = arith.constant 0 : i32
    return %arg0, %c0_i32 : i32, i32
  }
}

</mosaic_0001>

<llo_original>
// kernel: tpu_custom_call.1
$region0: #{tpu_custom_call.1}
  #allocation0 [shape = 'u32[]', space=smem, size = 0x4, offset = 0x4, fixed_abs, tag = 'smem constant byte address 0x4 - core index']
  #allocation1 [shape = 'u32[144,128]{1,0:T(1,128)}', space=vmem, size = 0x12000, scoped, tag = 'internal scratch']
  %s0 = inlined_call_operand.hbm [shape: f32[4,128], index: 0, kind: input, shape index: {}]
  %s1 = inlined_call_operand.vmem [shape: f32[1,128], index: 1, kind: input, shape index: {}]
  %s2 = inlined_call_operand.vmem [shape: f32[1,128], index: 2, kind: input, shape index: {}]
  %s3 = inlined_call_operand.hbm [shape: f32[128,128], index: 3, kind: input, shape index: {}]
  %s4 = inlined_call_operand.hbm [shape: f32[4,128], index: 4, kind: output, shape index: {}]
  %s5 = sld [smem:[#allocation0]]
  $region34: #{tpu_custom_call.1} parent=0
    _
  %s7 = ssub.s32 1, %s5
  %s8 = scalar_select 0, %s7, %s5
  $region1: #{tpu_custom_call.1} parent=0
    #allocation2 [shape = 'u8[4096]{0}', space=vmem, size = 0x1000, scoped, tag = 'input window, operand 0, single buffered']
    #allocation3 [shape = 's32[1]{0}', space=sflag, size = 0x4, scoped, tag = 'scoped memory for tpu_custom_call.1']
    #allocation4 [shape = 's32[1]{0}', space=sflag, size = 0x4, scoped, tag = 'scoped memory for tpu_custom_call.1']
    #allocation5 [shape = 'u8[65536]{0}', space=vmem, size = 0x10000, scoped, tag = 'input window, operand 3, single buffered']
    #allocation6 [shape = 's32[1]{0}', space=sflag, size = 0x4, scoped, tag = 'scoped memory for tpu_custom_call.1']
    #allocation7 [shape = 'u8[4096]{0}', space=vmem, size = 0x1000, scoped, tag = 'output window, operand 0, single buffered']
    %9 = vsyncpa [#allocation3], 0
    %10 = vsyncpa [#allocation6], 0
    %11 = vsyncpa [#allocation4], 0
    // Predicated region
    $region2: #{tpu_custom_call.1} parent=1 // pred_check
      _
    $region3: #{tpu_custom_call.1} parent=1 // pred_check_branch
      %13 = sbr.rel (0) target = $region5
    $region4: #{tpu_custom_call.1} parent=1 // pred_region
      %s15 = ssub.s32 128, 64
      %16 = vsyncadd [#allocation3], %s15
      %s17 = sshll.u32 [#allocation2], 4
      %s18 = int_to_ptr.vmem [resolvable:$true] %s17
      %23 = dma.hbm_to_vmem [thread:$0]  %s0, 64, %s18, [#allocation3], 64, 64, 4
    $region5: #{tpu_custom_call.1} parent=1 // pred_fallthru
      _
    // Predicated region
    $region6: #{tpu_custom_call.1} parent=1 // pred_check
      _
    $region7: #{tpu_custom_call.1} parent=1 // pred_check_branch
      %25 = sbr.rel (0) target = $region9
    $region8: #{tpu_custom_call.1} parent=1 // pred_region
      _
    $region9: #{tpu_custom_call.1} parent=1 // pred_fallthru
      _
    // Predicated region
    $region10: #{tpu_custom_call.1} parent=1 // pred_check
      _
    $region11: #{tpu_custom_call.1} parent=1 // pred_check_branch
      %27 = sbr.rel (0) target = $region13
    $region12: #{tpu_custom_call.1} parent=1 // pred_region
      _
    $region13: #{tpu_custom_call.1} parent=1 // pred_fallthru
      _
    // Predicated region
    $region14: #{tpu_custom_call.1} parent=1 // pred_check
      _
    $region15: #{tpu_custom_call.1} parent=1 // pred_check_branch
      %29 = sbr.rel (0) target = $region17
    $region16: #{tpu_custom_call.1} parent=1 // pred_region
      %s31 = ssub.s32 2048, 2048
      %32 = vsyncadd [#allocation6], %s31
      %s33 = sshll.u32 [#allocation5], 4
      %s34 = int_to_ptr.vmem [resolvable:$true] %s33
      %39 = dma.hbm_to_vmem [thread:$0]  %s3, 2048, %s34, [#allocation6], 128, 128, 8
    $region17: #{tpu_custom_call.1} parent=1 // pred_fallthru
      _
    // Predicated region
    $region18: #{tpu_custom_call.1} parent=1 // pred_check
      _
    $region19: #{tpu_custom_call.1} parent=1 // pred_check_branch
      %41 = sbr.rel (0) target = $region21
    $region20: #{tpu_custom_call.1} parent=1 // pred_region
      %42 = dma.done [#allocation3], 128
    $region21: #{tpu_custom_call.1} parent=1 // pred_fallthru
      _
    // Predicated region
    $region22: #{tpu_custom_call.1} parent=1 // pred_check
      _
    $region23: #{tpu_custom_call.1} parent=1 // pred_check_branch
      %44 = sbr.rel (0) target = $region25
    $region24: #{tpu_custom_call.1} parent=1 // pred_region
      %45 = dma.done [#allocation6], 2048
    $region25: #{tpu_custom_call.1} parent=1 // pred_fallthru
      _
    %v46 = vld [vmem:[#allocation2] sm:$0xff]
    %v47 = vld [vmem:[#allocation5] sm:$0xff]
    %v48 = vld [vmem:[#allocation5 + $0x8] sm:$0xff]
    %v49 = vld [vmem:[#allocation5 + $0x10] sm:$0xff]
    %v50 = vld [vmem:[#allocation5 + $0x18] sm:$0xff]
    %v51 = vld [vmem:[#allocation5 + $0x20] sm:$0xff]
    %v52 = vld [vmem:[#allocation5 + $0x28] sm:$0xff]
    %v53 = vld [vmem:[#allocation5 + $0x30] sm:$0xff]
    %v54 = vld [vmem:[#allocation5 + $0x38] sm:$0xff]
    %v55 = vld [vmem:[#allocation5 + $0x40] sm:$0xff]
    %v56 = vld [vmem:[#allocation5 + $0x48] sm:$0xff]
    %v57 = vld [vmem:[#allocation5 + $0x50] sm:$0xff]
    %v58 = vld [vmem:[#allocation5 + $0x58] sm:$0xff]
    %v59 = vld [vmem:[#allocation5 + $0x60] sm:$0xff]
    %v60 = vld [vmem:[#allocation5 + $0x68] sm:$0xff]
    %v61 = vld [vmem:[#allocation5 + $0x70] sm:$0xff]
    %v62 = vld [vmem:[#allocation5 + $0x78] sm:$0xff]
    %63 = vmatprep.subr.mxu0 0.0
    %64 = vmatpush1.msra.mxu0 %v47
    %65 = vmatprep.subr.mxu0 0.0
    %66 = vmatpush1.msra.mxu0 %v48
    %67 = vmatprep.subr.mxu0 0.0
    %68 = vmatpush1.msra.mxu0 %v49
    %69 = vmatprep.subr.mxu0 0.0
    %70 = vmatpush1.msra.mxu0 %v50
    %71 = vmatprep.subr.mxu0 0.0
    %72 = vmatpush1.msra.mxu0 %v51
    %73 = vmatprep.subr.mxu0 0.0
    %74 = vmatpush1.msra.mxu0 %v52
    %75 = vmatprep.subr.mxu0 0.0
    %76 = vmatpush1.msra.mxu0 %v53
    %77 = vmatprep.subr.mxu0 0.0
    %78 = vmatpush1.msra.mxu0 %v54
    %79 = vmatprep.subr.mxu0 0.0
    %80 = vmatpush1.msra.mxu0 %v55
    %81 = vmatprep.subr.mxu0 0.0
    %82 = vmatpush1.msra.mxu0 %v56
    %83 = vmatprep.subr.mxu0 0.0
    %84 = vmatpush1.msra.mxu0 %v57
    %85 = vmatprep.subr.mxu0 0.0
    %86 = vmatpush1.msra.mxu0 %v58
    %87 = vmatprep.subr.mxu0 0.0
    %88 = vmatpush1.msra.mxu0 %v59
    %89 = vmatprep.subr.mxu0 0.0
    %90 = vmatpush1.msra.mxu0 %v60
    %91 = vmatprep.subr.mxu0 0.0
    %92 = vmatpush1.msra.mxu0 %v61
    %93 = vmatprep.subr.mxu0 0.0
    %94 = vmatpush1.msra.mxu0 %v62
    %95 = vmatprep.subr.mxu0 0.0
    %96 = vmatpush1.msra.mxu0 0.0
    %97 = vmatprep.subr.mxu0 0.0
    %98 = vmatpush1.msra.mxu0 0.0
    %99 = vmatprep.subr.mxu0 0.0
    %100 = vmatpush1.msra.mxu0 0.0
    %101 = vmatprep.subr.mxu0 0.0
    %102 = vmatpush1.msra.mxu0 0.0
    %103 = vmatprep.subr.mxu0 0.0
    %104 = vmatpush1.msra.mxu0 0.0
    %105 = vmatprep.subr.mxu0 0.0
    %106 = vmatpush1.msra.mxu0 0.0
    %107 = vmatprep.subr.mxu0 0.0
    %108 = vmatpush1.msra.mxu0 0.0
    %109 = vmatprep.subr.mxu0 0.0
    %110 = vmatpush1.msra.mxu0 0.0
    %111 = vmatprep.subr.mxu0 0.0
    %112 = vmatpush1.msra.mxu0 0.0
    %113 = vmatprep.subr.mxu0 0.0
    %114 = vmatpush1.msra.mxu0 0.0
    %115 = vmatprep.subr.mxu0 0.0
    %116 = vmatpush1.msra.mxu0 0.0
    %117 = vmatprep.subr.mxu0 0.0
    %118 = vmatpush1.msra.mxu0 0.0
    %119 = vmatprep.subr.mxu0 0.0
    %120 = vmatpush1.msra.mxu0 0.0
    %121 = vmatprep.subr.mxu0 0.0
    %122 = vmatpush1.msra.mxu0 0.0
    %123 = vmatprep.subr.mxu0 0.0
    %124 = vmatpush1.msra.mxu0 0.0
    %125 = vmatprep.subr.mxu0 0.0
    %126 = vmatpush1.msra.mxu0 0.0
    %127 = vmatprep.mubr.f32.mxu0 0.0
    %128 = vmatmul.mubr.f32.gmra.mrb[0].mxu0 %v46
    %v129 = vpop.f32.mrb[0].mxu0
    %v130 = vadd.f32 0.0, %v129
    %v131 = vpop.f32.mrb[0].mxu0
    %132 = vdwg.mxu0
    %v133 = vsub.f32 %v46, %v130
    %v134 = vmul.f32 %v133, %v133
    %135 = vmatprep.subr.mxu0 0.0
    %136 = vmatpush1.msra.mxu0 %v47
    %137 = vmatprep.subr.mxu0 0.0
    %138 = vmatpush1.msra.mxu0 %v48
    %139 = vmatprep.subr.mxu0 0.0
    %140 = vmatpush1.msra.mxu0 %v49
    %141 = vmatprep.subr.mxu0 0.0
    %142 = vmatpush1.msra.mxu0 %v50
    %143 = vmatprep.subr.mxu0 0.0
    %144 = vmatpush1.msra.mxu0 %v51
    %145 = vmatprep.subr.mxu0 0.0
    %146 = vmatpush1.msra.mxu0 %v52
    %147 = vmatprep.subr.mxu0 0.0
    %148 = vmatpush1.msra.mxu0 %v53
    %149 = vmatprep.subr.mxu0 0.0
    %150 = vmatpush1.msra.mxu0 %v54
    %151 = vmatprep.subr.mxu0 0.0
    %152 = vmatpush1.msra.mxu0 %v55
    %153 = vmatprep.subr.mxu0 0.0
    %154 = vmatpush1.msra.mxu0 %v56
    %155 = vmatprep.subr.mxu0 0.0
    %156 = vmatpush1.msra.mxu0 %v57
    %157 = vmatprep.subr.mxu0 0.0
    %158 = vmatpush1.msra.mxu0 %v58
    %159 = vmatprep.subr.mxu0 0.0
    %160 = vmatpush1.msra.mxu0 %v59
    %161 = vmatprep.subr.mxu0 0.0
    %162 = vmatpush1.msra.mxu0 %v60
    %163 = vmatprep.subr.mxu0 0.0
    %164 = vmatpush1.msra.mxu0 %v61
    %165 = vmatprep.subr.mxu0 0.0
    %166 = vmatpush1.msra.mxu0 %v62
    %167 = vmatprep.subr.mxu0 0.0
    %168 = vmatpush1.msra.mxu0 0.0
    %169 = vmatprep.subr.mxu0 0.0
    %170 = vmatpush1.msra.mxu0 0.0
    %171 = vmatprep.subr.mxu0 0.0
    %172 = vmatpush1.msra.mxu0 0.0
    %173 = vmatprep.subr.mxu0 0.0
    %174 = vmatpush1.msra.mxu0 0.0
    %175 = vmatprep.subr.mxu0 0.0
    %176 = vmatpush1.msra.mxu0 0.0
    %177 = vmatprep.subr.mxu0 0.0
    %178 = vmatpush1.msra.mxu0 0.0
    %179 = vmatprep.subr.mxu0 0.0
    %180 = vmatpush1.msra.mxu0 0.0
    %181 = vmatprep.subr.mxu0 0.0
    %182 = vmatpush1.msra.mxu0 0.0
    %183 = vmatprep.subr.mxu0 0.0
    %184 = vmatpush1.msra.mxu0 0.0
    %185 = vmatprep.subr.mxu0 0.0
    %186 = vmatpush1.msra.mxu0 0.0
    %187 = vmatprep.subr.mxu0 0.0
    %188 = vmatpush1.msra.mxu0 0.0
    %189 = vmatprep.subr.mxu0 0.0
    %190 = vmatpush1.msra.mxu0 0.0
    %191 = vmatprep.subr.mxu0 0.0
    %192 = vmatpush1.msra.mxu0 0.0
    %193 = vmatprep.subr.mxu0 0.0
    %194 = vmatpush1.msra.mxu0 0.0
    %195 = vmatprep.subr.mxu0 0.0
    %196 = vmatpush1.msra.mxu0 0.0
    %197 = vmatprep.subr.mxu0 0.0
    %198 = vmatpush1.msra.mxu0 0.0
    %199 = vmatprep.mubr.f32.mxu0 0.0
    %200 = vmatmul.mubr.f32.gmra.mrb[0].mxu0 %v134
    %v201 = vpop.f32.mrb[0].mxu0
    %v202 = vadd.f32 1e-05, %v201
    %v203 = vpop.f32.mrb[0].mxu0
    %204 = vdwg.mxu0
    %v205 = vrsqrt.pop %v202
    %v206 = vmul.f32 %v133, %v205
    %v207 = vld [vmem:[%s1] sm:$0x1]
    %v209 = vlaneseq
    %v210 = vshrl.u32 %v209, 7
    %v211 = vsub.s32 0, %v210
    %v212 = vrot.slane %v207, %v211
    %v214 = vmul.f32 %v206, %v212
    %v215 = vld [vmem:[%s2] sm:$0x1]
    %v217 = vlaneseq
    %v218 = vshrl.u32 %v217, 7
    %v219 = vsub.s32 0, %v218
    %v220 = vrot.slane %v215, %v219
    %v222 = vadd.f32 %v214, %v220
    %223 = vst [vmem:[#allocation7] sm:$0xff] %v222
    // Predicated region
    $region26: #{tpu_custom_call.1} parent=1 // pred_check
      _
    $region27: #{tpu_custom_call.1} parent=1 // pred_check_branch
      %225 = sbr.rel (0) target = $region29
    $region28: #{tpu_custom_call.1} parent=1 // pred_region
      %s227 = ssub.s32 128, 64
      %228 = vsyncadd [#allocation4], %s227
      %s229 = sshll.u32 [#allocation7], 4
      %s230 = int_to_ptr.vmem [resolvable:$true] %s229
      %235 = dma.vmem_to_hbm [thread:$0]  %s230, 64, %s4, [#allocation4], 64, 64, 4
    $region29: #{tpu_custom_call.1} parent=1 // pred_fallthru
      _
    // Predicated region
    $region30: #{tpu_custom_call.1} parent=1 // pred_check
      _
    $region31: #{tpu_custom_call.1} parent=1 // pred_check_branch
      %237 = sbr.rel (0) target = $region33
    $region32: #{tpu_custom_call.1} parent=1 // pred_region
      %238 = dma.done [#allocation4], 128
    $region33: #{tpu_custom_call.1} parent=1 // pred_fallthru
      _
    %239 = vsyncpa [#allocation3], 1
    %240 = vsyncpa [#allocation6], 1
    %241 = vsyncpa [#allocation4], 1

</llo_original>
